<compile_context>
chip_gen: v7x
topology: tpu7x:2x2x1
jax: 0.10.0
libtpu: 0.0.40
codegen_flags: <defaults>
</compile_context>

<pallas_src>
import functools

import jax
import jax.numpy as jnp
from jax import lax
from jax.experimental import pallas as pl
from jax.experimental.pallas import tpu as pltpu


# ----------------------------- in-kernel helpers ------------------------------

def _affine_silu(v, scale, shift):
    """Folded GroupNorm affine (scale = gamma*rstd, shift = beta - mean*scale) + SiLU."""
    y = v.astype(jnp.float32) * scale + shift
    return y * jax.nn.sigmoid(y)


def _halo_rows_act(top_ref, bot_ref, scale, shift):
    """Activate the 1-row halos; zero them at the image border (conv zero-pad)."""
    s_id = pl.program_id(1)
    n_s = pl.num_programs(1)
    top = _affine_silu(top_ref[0, 0], scale, shift) * (s_id > 0).astype(jnp.float32)
    bot = _affine_silu(bot_ref[0, 0], scale, shift) * (s_id < n_s - 1).astype(jnp.float32)
    return top.astype(jnp.bfloat16), bot.astype(jnp.bfloat16)


def _conv3x3_accum(hb, top, bot, w_ref, W):
    """3x3 same-conv on one R-row strip as 3 row-group MXU matmuls (K = 3*C each).

      hb  : (C, R*W) bf16  activated strip (rows y)
      top : (C, W)   bf16  activated row above the strip (zeros at image top)
      bot : (C, W)   bf16  activated row below the strip (zeros at image bottom)
      w   : (Cout, 9*C) bf16, packed (ky, kx, cin)
    returns (Cout, R*W) f32 accumulator.
    """
    C, RW = hb.shape
    lane = lax.broadcasted_iota(jnp.int32, (1, RW), 1)
    colx = lane - (lane // W) * W
    not_first = (colx > 0).astype(jnp.bfloat16)      # kills dx=-1 wrap into column 0
    not_last = (colx < W - 1).astype(jnp.bfloat16)   # kills dx=+1 wrap into column W-1

    row_groups = (
        jnp.concatenate([top, hb[:, :RW - W]], axis=1),   # input rows y-1
        hb,                                               # input rows y
        jnp.concatenate([hb[:, W:], bot], axis=1),        # input rows y+1
    )
    acc = None
    for ky, g in enumerate(row_groups):
        left = pltpu.roll(g, shift=1, axis=1) * not_first        # tap dx=-1
        right = pltpu.roll(g, shift=RW - 1, axis=1) * not_last   # tap dx=+1
        chunk = jnp.concatenate([left, g, right], axis=0)        # (3C, RW) bf16
        part = jnp.dot(w_ref[:, 3 * C * ky:3 * C * (ky + 1)], chunk,
                       preferred_element_type=jnp.float32)
        acc = part if acc is None else acc + part
    return acc


# --------------------------------- kernels ------------------------------------

def _gn_stats_kernel(x_ref, st_ref):
    """Per-strip per-channel [sum, sumsq] of x (for GroupNorm 1)."""
    x = x_ref[0]                                              # (C, RW) f32
    st_ref[0, 0] = jnp.concatenate(
        [jnp.sum(x, axis=1, keepdims=True),
         jnp.sum(x * x, axis=1, keepdims=True)], axis=1)      # (C, 2)


def _gn_silu_conv3x3_kernel(x_ref, top_ref, bot_ref, sc_ref, sh_ref, w_ref, b_ref,
                            h_ref, st_ref, *, W):
    """silu(GN1(x)) -> conv1 (+bias); also emits GN2 partial statistics."""
    scale = sc_ref[0]                                         # (Cin, 1)
    shift = sh_ref[0]
    hb = _affine_silu(x_ref[0], scale, shift).astype(jnp.bfloat16)
    top, bot = _halo_rows_act(top_ref, bot_ref, scale, shift)
    h1 = _conv3x3_accum(hb, top, bot, w_ref, W) + b_ref[...]  # (Cout, RW) f32
    h_ref[0] = h1.astype(h_ref.dtype)                         # bf16 to HBM
    st_ref[0, 0] = jnp.concatenate(
        [jnp.sum(h1, axis=1, keepdims=True),
         jnp.sum(h1 * h1, axis=1, keepdims=True)], axis=1)


def _gn_silu_conv3x3_res_kernel(h_ref, top_ref, bot_ref, sc_ref, sh_ref, w_ref,
                                x_ref, *rest, W, has_nin):
    """silu(GN2(h1)) -> conv2, + shortcut(x), + fused (conv2 + nin) bias."""
    if has_nin:
        wn_ref, b_ref, o_ref = rest
    else:
        b_ref, o_ref = rest
    scale = sc_ref[0]                                         # (Cout, 1)
    shift = sh_ref[0]
    hb = _affine_silu(h_ref[0], scale, shift).astype(jnp.bfloat16)
    top, bot = _halo_rows_act(top_ref, bot_ref, scale, shift)
    acc = _conv3x3_accum(hb, top, bot, w_ref, W)              # (Cout, RW) f32
    x = x_ref[0]                                              # (Cin, RW) f32
    if has_nin:                                               # 1x1 shortcut as extra K-chunk
        acc = acc + jnp.dot(wn_ref[...], x.astype(jnp.bfloat16),
                            preferred_element_type=jnp.float32)
    else:                                                     # identity residual in f32
        acc = acc + x
    o_ref[0] = (acc + b_ref[...]).astype(o_ref.dtype)


# --------------------------------- wrapper -------------------------------------

def pack_resnet_block_params(params, num_groups=32, eps=1e-6):
    """One-time parameter repack (hoisted out of the forward path):
    conv weights -> (Cout, 9*Cin) im2col rows in bf16, biases/affines as columns."""
    Cin = params["conv1_w"].shape[2]
    Cout = params["conv1_w"].shape[3]
    w1 = jnp.transpose(params["conv1_w"], (3, 0, 1, 2)).reshape(Cout, 9 * Cin)
    w2 = jnp.transpose(params["conv2_w"], (3, 0, 1, 2)).reshape(Cout, 9 * Cout)
    packed = {
        "num_groups": num_groups, "eps": eps,
        "g1": params["norm1_g"].astype(jnp.float32),
        "b1": params["norm1_b"].astype(jnp.float32),
        "w1": w1.astype(jnp.bfloat16),
        "cb1": params["conv1_b"].reshape(Cout, 1).astype(jnp.float32),
        "g2": params["norm2_g"].astype(jnp.float32),
        "b2": params["norm2_b"].astype(jnp.float32),
        "w2": w2.astype(jnp.bfloat16),
    }
    if "nin_w" in params:                       # in_channels != out_channels
        packed["wn"] = params["nin_w"].T.astype(jnp.bfloat16)           # (Cout, Cin)
        packed["cb2"] = (params["conv2_b"] + params["nin_b"]).reshape(Cout, 1).astype(jnp.float32)
    else:                                       # identity shortcut
        packed["cb2"] = params["conv2_b"].reshape(Cout, 1).astype(jnp.float32)
    return packed


def _pick_rows(H, W, Cin, Cout, vmem_limit, max_rows=None):
    """Largest strip height R dividing H with (R*W) % 128 == 0 under the VMEM budget."""
    if max_rows is None:
        per_rw = 24 * Cin + 40 * Cout                 # rough bytes per lane column (kernel C)
        budget = int(0.4 * vmem_limit)                # leave room for weights / scratch
        max_rows = max(budget // max(per_rw * W, 1), 1)
    max_rows = min(max_rows, H)
    cands = [r for r in range(1, H + 1)
             if H % r == 0 and ((r * W) % 128 == 0 or r == H)]
    fitting = [r for r in cands if r <= max_rows]
    return max(fitting) if fitting else min(cands)


def _strip_halos(a3, N, C, H, W, R):
    """Row directly above / below each R-row strip (zero at the image border).
    a3: (N, C, H*W) -> two (N, S, C, W) arrays (tiny: 2/R of the tensor)."""
    S = H // R
    a4 = a3.reshape(N, C, H, W)
    z = jnp.zeros((N, C, 1, W), a3.dtype)
    top = jnp.concatenate([z, a4[:, :, R - 1:H - 1:R, :]], axis=2)    # (N, C, S, W)
    bot = jnp.concatenate([a4[:, :, R:H:R, :], z], axis=2)
    return jnp.transpose(top, (0, 2, 1, 3)), jnp.transpose(bot, (0, 2, 1, 3))


def _gn_scale_shift(stats, gamma, beta, num_groups, eps, count):
    """Tiny (N, C) math: per-strip [sum, sumsq] -> folded GN affine (scale, shift)."""
    N, _, C, _ = stats.shape
    per_chan = jnp.sum(stats, axis=1)                                   # (N, C, 2)
    grp = jnp.sum(per_chan.reshape(N, num_groups, C // num_groups, 2), axis=2)
    mean = grp[..., 0] / count                                          # (N, G)
    var = jnp.maximum(grp[..., 1] / count - mean * mean, 0.0)
    rstd = lax.rsqrt(var + eps)
    mean_c = jnp.repeat(mean, C // num_groups, axis=1)                  # (N, C)
    rstd_c = jnp.repeat(rstd, C // num_groups, axis=1)
    scale = rstd_c * gamma[None, :]
    shift = beta[None, :] - mean_c * scale
    return (scale.reshape(N, C, 1).astype(jnp.float32),
            shift.reshape(N, C, 1).astype(jnp.float32))


def resnet_block_forward(x_nchw, packed, *, max_rows_per_strip=None):
    """ResnetBlock.forward(x, temb=None): NCHW in -> NCHW out (f32)."""
    N, Cin, H, W = x_nchw.shape
    Cout = packed["cb1"].shape[0]
    G, eps = packed["num_groups"], packed["eps"]
    if Cin % G or Cout % G:
        raise ValueError("num_channels must be divisible by num_groups")
    HW = H * W

    # Generation-aware scoped-VMEM limit (~48 MiB on v7x, ~96 MiB on v5e/v6e).
    try:
        vmem_cap = int(pltpu.get_tpu_info().vmem_capacity_bytes)
    except Exception:
        vmem_cap = 64 * 1024 * 1024
    vmem_limit = int(min(max(int(0.75 * vmem_cap), 32 << 20), 112 << 20))

    R = _pick_rows(H, W, Cin, Cout, vmem_limit, max_rows_per_strip)
    S = H // R
    RW = R * W

    cparams = pltpu.CompilerParams(
        dimension_semantics=("parallel", "parallel"),
        vmem_limit_bytes=vmem_limit)

    x3 = x_nchw.reshape(N, Cin, HW).astype(jnp.float32)      # free reshape, stays NCHW

    # ---- pass 1: GroupNorm-1 statistics over x strips -----------------------
    st1 = pl.pallas_call(
        _gn_stats_kernel,
        out_shape=jax.ShapeDtypeStruct((N, S, Cin, 2), jnp.float32),
        grid=(N, S),
        in_specs=[pl.BlockSpec((1, Cin, RW), lambda n, s: (n, 0, s))],
        out_specs=pl.BlockSpec((1, 1, Cin, 2), lambda n, s: (n, s, 0, 0)),
        compiler_params=cparams,
    )(x3)
    scale1, shift1 = _gn_scale_shift(st1, packed["g1"], packed["b1"], G, eps,
                                     (Cin // G) * HW)
    x_top, x_bot = _strip_halos(x3, N, Cin, H, W, R)

    # ---- pass 2: silu(GN1(x)) -> conv1 (+bias); GN2 partial stats ------------
    kernel_b = functools.partial(_gn_silu_conv3x3_kernel, W=W)
    h1, st2 = pl.pallas_call(
        kernel_b,
        out_shape=(jax.ShapeDtypeStruct((N, Cout, HW), jnp.bfloat16),
                   jax.ShapeDtypeStruct((N, S, Cout, 2), jnp.float32)),
        grid=(N, S),
        in_specs=[
            pl.BlockSpec((1, Cin, RW), lambda n, s: (n, 0, s)),
            pl.BlockSpec((1, 1, Cin, W), lambda n, s: (n, s, 0, 0)),
            pl.BlockSpec((1, 1, Cin, W), lambda n, s: (n, s, 0, 0)),
            pl.BlockSpec((1, Cin, 1), lambda n, s: (n, 0, 0)),
            pl.BlockSpec((1, Cin, 1), lambda n, s: (n, 0, 0)),
            pl.BlockSpec(packed["w1"].shape, lambda n, s: (0, 0)),
            pl.BlockSpec((Cout, 1), lambda n, s: (0, 0)),
        ],
        out_specs=(pl.BlockSpec((1, Cout, RW), lambda n, s: (n, 0, s)),
                   pl.BlockSpec((1, 1, Cout, 2), lambda n, s: (n, s, 0, 0))),
        compiler_params=cparams,
    )(x3, x_top, x_bot, scale1, shift1, packed["w1"], packed["cb1"])

    scale2, shift2 = _gn_scale_shift(st2, packed["g2"], packed["b2"], G, eps,
                                     (Cout // G) * HW)
    h_top, h_bot = _strip_halos(h1, N, Cout, H, W, R)

    # ---- pass 3: silu(GN2(h1)) -> conv2 + shortcut(x) ------------------------
    has_nin = "wn" in packed
    kernel_c = functools.partial(_gn_silu_conv3x3_res_kernel, W=W, has_nin=has_nin)
    in_specs = [
        pl.BlockSpec((1, Cout, RW), lambda n, s: (n, 0, s)),
        pl.BlockSpec((1, 1, Cout, W), lambda n, s: (n, s, 0, 0)),
        pl.BlockSpec((1, 1, Cout, W), lambda n, s: (n, s, 0, 0)),
        pl.BlockSpec((1, Cout, 1), lambda n, s: (n, 0, 0)),
        pl.BlockSpec((1, Cout, 1), lambda n, s: (n, 0, 0)),
        pl.BlockSpec(packed["w2"].shape, lambda n, s: (0, 0)),
        pl.BlockSpec((1, Cin, RW), lambda n, s: (n, 0, s)),
    ]
    args = [h1, h_top, h_bot, scale2, shift2, packed["w2"], x3]
    if has_nin:
        in_specs.append(pl.BlockSpec(packed["wn"].shape, lambda n, s: (0, 0)))
        args.append(packed["wn"])
    in_specs.append(pl.BlockSpec((Cout, 1), lambda n, s: (0, 0)))
    args.append(packed["cb2"])

    out3 = pl.pallas_call(
        kernel_c,
        out_shape=jax.ShapeDtypeStruct((N, Cout, HW), jnp.float32),
        grid=(N, S),
        in_specs=in_specs,
        out_specs=pl.BlockSpec((1, Cout, RW), lambda n, s: (n, 0, s)),
        compiler_params=cparams,
    )(*args)
    return out3.reshape(N, Cout, H, W)


# ---------------------------- reference (pure JAX, f32) ------------------------

def _ref_groupnorm_silu(x, g, b, G, eps=1e-6):
    N, H, W, C = x.shape
    xr = x.reshape(N, H, W, G, C // G)
    mean = xr.mean(axis=(1, 2, 4), keepdims=True)
    var = ((xr - mean) ** 2).mean(axis=(1, 2, 4), keepdims=True)
    y = ((xr - mean) / jnp.sqrt(var + eps)).reshape(N, H, W, C) * g + b
    return y * jax.nn.sigmoid(y)


def _ref_conv3x3(x, w, b):
    y = lax.conv_general_dilated(x, w, (1, 1), ((1, 1), (1, 1)),
                                 dimension_numbers=("NHWC", "HWIO", "NHWC"))
    return y + b


def _ref_forward(x_nchw, p, G=32):
    x = jnp.transpose(x_nchw, (0, 2, 3, 1))
    h = _ref_groupnorm_silu(x, p["norm1_g"], p["norm1_b"], G)
    h = _ref_conv3x3(h, p["conv1_w"], p["conv1_b"])
    h = _ref_groupnorm_silu(h, p["norm2_g"], p["norm2_b"], G)
    h = _ref_conv3x3(h, p["conv2_w"], p["conv2_b"])
    if "nin_w" in p:
        sc = jnp.einsum("nhwc,co->nhwo", x, p["nin_w"]) + p["nin_b"]
    else:
        sc = x
    return jnp.transpose(sc + h, (0, 3, 1, 2))


# ----------------------------------- main --------------------------------------

if __name__ == "__main__":
    N, H, W, G = 2, 16, 16, 32
    key = jax.random.PRNGKey(0)

    def make_params(k, Cin, Cout, with_nin):
        ks = jax.random.split(k, 10)
        p = {
            "norm1_g": 1.0 + 0.1 * jax.random.normal(ks[0], (Cin,), jnp.float32),
            "norm1_b": 0.1 * jax.random.normal(ks[1], (Cin,), jnp.float32),
            "conv1_w": 0.05 * jax.random.normal(ks[2], (3, 3, Cin, Cout), jnp.float32),
            "conv1_b": 0.05 * jax.random.normal(ks[3], (Cout,), jnp.float32),
            "norm2_g": 1.0 + 0.1 * jax.random.normal(ks[4], (Cout,), jnp.float32),
            "norm2_b": 0.1 * jax.random.normal(ks[5], (Cout,), jnp.float32),
            "conv2_w": 0.05 * jax.random.normal(ks[6], (3, 3, Cout, Cout), jnp.float32),
            "conv2_b": 0.05 * jax.random.normal(ks[7], (Cout,), jnp.float32),
        }
        if with_nin:
            p["nin_w"] = 0.05 * jax.random.normal(ks[8], (Cin, Cout), jnp.float32)
            p["nin_b"] = 0.05 * jax.random.normal(ks[9], (Cout,), jnp.float32)
        return p

    cases = [(32, 64, True),    # in != out  -> 1x1 nin_shortcut folded into conv2 pass
             (32, 32, False)]   # in == out  -> exact f32 identity residual
    kx = jax.random.split(key, len(cases) + 1)
    for idx, (Cin, Cout, with_nin) in enumerate(cases):
        params = make_params(kx[idx], Cin, Cout, with_nin)
        packed = pack_resnet_block_params(params, num_groups=G)
        x = jax.random.normal(kx[-1], (N, Cin, H, W), jnp.float32)   # NCHW
        # max_rows_per_strip=8 -> 2 strips, so the halo / strip path is exercised.
        out = jax.block_until_ready(
            resnet_block_forward(x, packed, max_rows_per_strip=8))
        assert out.shape == (N, Cout, H, W), out.shape
        ref = jax.block_until_ready(_ref_forward(x, params, G))
        err = float(jnp.max(jnp.abs(out - ref)))
        # bf16 MXU operands with f32 accumulation -> compare at 2e-2.
        assert jnp.allclose(out, ref, rtol=2e-2, atol=2e-2), err

    print("KERNEL_OK")
</pallas_src>

<mosaic_0001>
module attributes {stable_mosaic.version = 11 : i64} {
  func.func @_gn_stats_kernel(%arg0: i32, %arg1: i32, %arg2: memref<1x32x128xf32, #tpu.memory_space<vmem>>, %arg3: memref<1x1x32x2xf32, #tpu.memory_space<vmem>>) attributes {dimension_semantics = [#tpu.dimension_semantics<parallel>, #tpu.dimension_semantics<parallel>], iteration_bounds = array<i64: 2, 2>, scalar_prefetch = 0 : i64, scratch_operands = 0 : i64, tpu.core_type = #tpu.core_type<tc>, window_params = [{transform_indices = @transform_0, window_bounds = array<i64: 1, 32, 128>}, {transform_indices = @transform_1, window_bounds = array<i64: 1, 1, 32, 2>}]} {
    %c0 = arith.constant 0 : index
    %c0_0 = arith.constant 0 : index
    %c0_1 = arith.constant 0 : index
    %0 = vector.load %arg2[%c0, %c0_0, %c0_1] : memref<1x32x128xf32, #tpu.memory_space<vmem>>, vector<1x32x128xf32>
    %1 = vector.shape_cast %0 : vector<1x32x128xf32> to vector<32x128xf32>
    %cst = arith.constant dense<0.000000e+00> : vector<32xf32>
    %2 = vector.multi_reduction <add>, %1, %cst [1] : vector<32x128xf32> to vector<32xf32>
    %3 = vector.shape_cast %2 : vector<32xf32> to vector<32x1xf32>
    %4 = arith.mulf %1, %1 : vector<32x128xf32>
    %cst_2 = arith.constant dense<0.000000e+00> : vector<32xf32>
    %5 = vector.multi_reduction <add>, %4, %cst_2 [1] : vector<32x128xf32> to vector<32xf32>
    %6 = vector.shape_cast %5 : vector<32xf32> to vector<32x1xf32>
    %7 = tpu.concatenate %3, %6 in 1 : vector<32x1xf32>, vector<32x1xf32> -> vector<32x2xf32>
    %c0_3 = arith.constant 0 : index
    %c0_4 = arith.constant 0 : index
    %c0_5 = arith.constant 0 : index
    %c0_6 = arith.constant 0 : index
    %8 = vector.load %arg3[%c0_3, %c0_4, %c0_5, %c0_6] : memref<1x1x32x2xf32, #tpu.memory_space<vmem>>, vector<1x1x32x2xf32>
    %9 = vector.shape_cast %8 : vector<1x1x32x2xf32> to vector<32x2xf32>
    %10 = vector.shape_cast %7 : vector<32x2xf32> to vector<1x1x32x2xf32>
    tpu.vector_store %arg3[%c0_3, %c0_4, %c0_5, %c0_6], %10 {strides = array<i32>} : memref<1x1x32x2xf32, #tpu.memory_space<vmem>>, vector<1x1x32x2xf32>,
    return
  }
  func.func @transform_0(%arg0: i32, %arg1: i32) -> (i32, i32, i32) {
    %c0_i32 = arith.constant 0 : i32
    %c0_i32_0 = arith.constant 0 : i32
    return %arg0, %c0_i32, %arg1 : i32, i32, i32
  }
  func.func @transform_1(%arg0: i32, %arg1: i32) -> (i32, i32, i32, i32) {
    %c0_i32 = arith.constant 0 : i32
    %c0_i32_0 = arith.constant 0 : i32
    %c0_i32_1 = arith.constant 0 : i32
    return %arg0, %arg1, %c0_i32, %c0_i32_0 : i32, i32, i32, i32
  }
}

</mosaic_0001>

<llo_original>
// kernel: tpu_custom_call.1
$region0: #{tpu_custom_call.1}
  #allocation0 [shape = 'u32[]', space=smem, size = 0x4, offset = 0x4, fixed_abs, tag = 'smem constant byte address 0x4 - core index']
  #allocation1 [shape = 'u32[144,128]{1,0:T(1,128)}', space=vmem, size = 0x12000, scoped, tag = 'internal scratch']
  %s0 = inlined_call_operand.hbm [shape: f32[2,32,256], index: 0, kind: input, shape index: {}]
  %s1 = inlined_call_operand.vmem [shape: f32[2,2,32,2], index: 1, kind: output, shape index: {}]
  %s2 = sld [smem:[#allocation0]]
  $region41: #{tpu_custom_call.1} parent=0
    _
  %s4 = ssub.s32 1, %s2
  %s5 = scalar_select 0, %s4, %s2
  $region1: #{tpu_custom_call.1} parent=0
    #allocation2 [shape = 'u8[32768]{0}', space=vmem, size = 0x8000, scoped, tag = 'input window, operand 0']
    #allocation3 [shape = 's32[2]{0}', space=sflag, size = 0x8, scoped, tag = 'scoped memory for tpu_custom_call.1']
    %6 = vsyncpa [#allocation3], 0
    %s7 = scalar_lea.sflag [#allocation3], 1
    %8 = vsyncpa %s7, 0
    loop: start=0, step=1, limit=6
    $region2: #{tpu_custom_call.1} parent=1 // loop_pre_header
      _
    $region3: #{tpu_custom_call.1} parent=1 // loop_header
      %s10 = sphi 0, %s14
      %p11 = scmp.ge.s32.totalorder %s10, 6
      %s17 = sphi 0, %s29
      %s18 = sphi 0, %s25
      %s19 = sphi 0, %s17
      %s20 = sphi 0, %s18
      %s21 = sphi 0, %s19
      %s22 = sphi 0, %s20
      %s34 = sphi 0, %s36
      %s37 = sphi 0, %s34
      %s38 = sphi 0, %s37
      %s54 = sphi 0, %s38
      %s62 = sphi 0, %s64
      %s65 = sphi 0, %s62
      %s66 = sphi 0, %s65
      %s82 = sphi 0, %s66
    $region4: #{tpu_custom_call.1} parent=1 // loop_header_branch
      %13 = sbr.rel (%p11) target = $region8
    $region5: #{tpu_custom_call.1} parent=1 // loop_body
      %s15 = ssub.s32 %s10, 1
      %s16 = ssub.s32 %s10, 2
      %s23 = sadd.s32 1, %s18
      %p24 = scmp.ge.s32.totalorder %s23, 2
      %s25 = scalar_select %p24, 0, %s23
      %s26 = sadd.s32 1, %s17
      %s27 = scalar_select %p24, %s26, %s17
      %p28 = scmp.ge.s32.totalorder %s27, 2
      %s29 = scalar_select %p28, 0, %s27
      %s30 = ssub.s32 %s17, %s29
      %s31 = ssub.s32 %s18, %s25
      %s32 = sor.u32 %s30, %s31
      %p33 = scmp.eq.s32.totalorder %s32, 0
      %s35 = sadd.s32 %s34, 1
      %s36 = scalar_select %p33, %s34, %s35
      %p39 = pneg %p33
      %p40 = scmp.eq.s32.totalorder %s10, 3
      %p41 = por %p39, %p40
      %p42 = scmp.ne.s32.totalorder %s34, %s37
      %p43 = scmp.eq.s32.totalorder %s10, 0
      %p44 = por %p42, %p43
      %p45 = scmp.ne.s32.totalorder %s34, %s37
      %p46 = scmp.eq.s32.totalorder %s15, 3
      %p47 = por %p45, %p46
      %p48 = scmp.ne.s32.totalorder %s37, %s38
      %p49 = scmp.eq.s32.totalorder %s15, 0
      %p50 = por %p48, %p49
      %p51 = scmp.ne.s32.totalorder %s37, %s38
      %p52 = scmp.eq.s32.totalorder %s16, 3
      %p53 = por %p51, %p52
      %p55 = scmp.ne.s32.totalorder %s38, %s54
      %p56 = scmp.eq.s32.totalorder %s16, 0
      %p57 = por %p55, %p56
      %s58 = ssub.s32 %s17, %s29
      %s59 = ssub.s32 %s18, %s25
      %s60 = sor.u32 %s58, %s59
      %p61 = scmp.eq.s32.totalorder %s60, 0
      %s63 = sadd.s32 %s62, 1
      %s64 = scalar_select %p61, %s62, %s63
      %p67 = pneg %p61
      %p68 = scmp.eq.s32.totalorder %s10, 3
      %p69 = por %p67, %p68
      %p70 = scmp.ne.s32.totalorder %s62, %s65
      %p71 = scmp.eq.s32.totalorder %s10, 0
      %p72 = por %p70, %p71
      %p73 = scmp.ne.s32.totalorder %s62, %s65
      %p74 = scmp.eq.s32.totalorder %s15, 3
      %p75 = por %p73, %p74
      %p76 = scmp.ne.s32.totalorder %s65, %s66
      %p77 = scmp.eq.s32.totalorder %s15, 0
      %p78 = por %p76, %p77
      %p79 = scmp.ne.s32.totalorder %s65, %s66
      %p80 = scmp.eq.s32.totalorder %s16, 3
      %p81 = por %p79, %p80
      %p83 = scmp.ne.s32.totalorder %s66, %s82
      %p84 = scmp.eq.s32.totalorder %s16, 0
      %p85 = por %p83, %p84
      %p86 = scmp.le.s32.totalorder 1, %s10
      %p87 = scmp.lt.s32.totalorder %s10, 5
      %p88 = pnand %p86, %p87
      %p89 = pneg %p88
      // Predicated region
      $region9: #{tpu_custom_call.1} parent=5 // pred_check
        _
      $region10: #{tpu_custom_call.1} parent=5 // pred_check_branch
        %91 = sbr.rel (%p88) target = $region12
      $region11: #{tpu_custom_call.1} parent=5 // pred_region
        %s92 = ssub.s32 %s10, 1
      $region12: #{tpu_custom_call.1} parent=5 // pred_fallthru
        _
      %p93 = scmp.lt.s32.totalorder %s10, 4
      // Predicated region
      $region13: #{tpu_custom_call.1} parent=5 // pred_check
        %p94 = pneg %p93
      $region14: #{tpu_custom_call.1} parent=5 // pred_check_branch
        %96 = sbr.rel (%p94) target = $region16
      $region15: #{tpu_custom_call.1} parent=5 // pred_region
        // Predicated region
        $region17: #{tpu_custom_call.1} parent=15 // pred_check
          %p97 = pneg %p44
        $region18: #{tpu_custom_call.1} parent=15 // pred_check_branch
          %99 = sbr.rel (%p97) target = $region20
        $region19: #{tpu_custom_call.1} parent=15 // pred_region
          %s100 = sand.u32 %s34, 1
          %s101 = scalar_lea.sflag [#allocation3], %s100
          %s102 = sand.u32 %s34, 1
          %s103 = smul.addr %s102, 32
          %s104 = scalar_lea.vmem [#allocation2], %s103
          %s106 = ssub.s32 512, 512
          %107 = vsyncadd %s101, %s106
          %s108 = smul.addr %s17, 8
          %s109 = sadd.s32 %s18, %s108
          %s110 = smul.addr %s109, 128
          %s111 = scalar_lea.hbm %s0, %s110
          %s112 = sshll.u32 %s104, 4
          %s113 = int_to_ptr.vmem [resolvable:$true] %s112
          %118 = dma.hbm_to_vmem [thread:$0]  %s111, 512, %s113, %s101, 256, 128, 8
        $region20: #{tpu_custom_call.1} parent=15 // pred_fallthru
          _
      $region16: #{tpu_custom_call.1} parent=5 // pred_fallthru
        _
      %p119 = scmp.le.s32.totalorder 1, %s10
      %p120 = scmp.lt.s32.totalorder %s10, 5
      %p121 = pnand %p119, %p120
      %p122 = pneg %p121
      // Predicated region
      $region21: #{tpu_custom_call.1} parent=5 // pred_check
        _
      $region22: #{tpu_custom_call.1} parent=5 // pred_check_branch
        %124 = sbr.rel (%p121) target = $region24
      $region23: #{tpu_custom_call.1} parent=5 // pred_region
        %s125 = ssub.s32 %s10, 1
        %s126 = sand.u32 %s37, 1
        %s127 = scalar_lea.sflag [#allocation3], %s126
        %s128 = sand.u32 %s37, 1
        %s129 = smul.addr %s128, 32
        %s130 = scalar_lea.vmem [#allocation2], %s129
        // Predicated region
        $region25: #{tpu_custom_call.1} parent=23 // pred_check
          %p131 = pneg %p50
        $region26: #{tpu_custom_call.1} parent=23 // pred_check_branch
          %133 = sbr.rel (%p131) target = $region28
        $region27: #{tpu_custom_call.1} parent=23 // pred_region
          %134 = dma.done %s127, 512
        $region28: #{tpu_custom_call.1} parent=23 // pred_fallthru
          _
        %s135 = sand.u32 %s37, 1
        %s136 = scalar_lea.sflag [#allocation3], %s135
        %s137 = sand.u32 %s37, 1
        %s138 = smul.addr %s137, 32
        %s139 = scalar_lea.vmem [#allocation2], %s138
        %p140 = pneg %p50
        %p141 = pneg %p47
        %p142 = pneg %p78
        %p143 = pneg %p75
        %p144 = scmp.lt.s32.totalorder %s19, 1
        %s145 = scalar_select %p144, %s19, 1
        %p146 = scmp.lt.s32.totalorder %s20, 1
        %s147 = scalar_select %p146, %s20, 1
        %s148 = smul.addr %s147, 4
        %s149 = smul.addr %s145, 8
        %s150 = sadd.s32 %s148, %s149
        %s151 = smul.addr %s150, 8
        %s152 = scalar_lea.vmem %s1, %s151
        %p153 = scmp.lt.s32.totalorder %s19, 1
        %s154 = scalar_select %p153, %s19, 1
        %p155 = scmp.lt.s32.totalorder %s20, 1
        %s156 = scalar_select %p155, %s20, 1
        %s157 = smul.addr %s156, 4
        %s158 = smul.addr %s154, 8
        %s159 = sadd.s32 %s157, %s158
        %s160 = smul.addr %s159, 8
        %s161 = scalar_lea.vmem %s1, %s160
        %v162 = vld [vmem:[%s130] sm:$0xff]
        %v163 = vld [vmem:[%s130 + $0x8] sm:$0xff]
        %v164 = vld [vmem:[%s130 + $0x10] sm:$0xff]
        %v165 = vld [vmem:[%s130 + $0x18] sm:$0xff]
        %166 = vadd.xlane.f32.xlu0 %v162
        %v167 = vpop.xlane.xlu0 %166
        %168 = vadd.xlane.f32.xlu0 %v163
        %v169 = vpop.xlane.xlu0 %168
        %170 = vadd.xlane.f32.xlu0 %v164
        %v171 = vpop.xlane.xlu0 %170
        %172 = vadd.xlane.f32.xlu0 %v165
        %v173 = vpop.xlane.xlu0 %172
        %v174 = vmul.f32 %v162, %v162
        %v175 = vmul.f32 %v163, %v163
        %v176 = vmul.f32 %v164, %v164
        %v177 = vmul.f32 %v165, %v165
        %178 = vadd.xlane.f32.xlu0 %v174
        %v179 = vpop.xlane.xlu0 %178
        %180 = vadd.xlane.f32.xlu0 %v175
        %v181 = vpop.xlane.xlu0 %180
        %182 = vadd.xlane.f32.xlu0 %v176
        %v183 = vpop.xlane.xlu0 %182
        %184 = vadd.xlane.f32.xlu0 %v177
        %v185 = vpop.xlane.xlu0 %184
        %vm186 = vcmask 7168
        %v187 = vsel %vm186, %v167, %v179
        %v188 = vsel %vm186, %v169, %v181
        %v189 = vsel %vm186, %v171, %v183
        %v190 = vsel %vm186, %v173, %v185
        %vm191 = vcmask 15360
        %192 = vst.msk [vmem:[%s161] sm:$0xff] %vm191, %v187
        %193 = vst.msk [vmem:[%s161 + $0x8] sm:$0xff] %vm191, %v188
        %194 = vst.msk [vmem:[%s161 + $0x10] sm:$0xff] %vm191, %v189
        %195 = vst.msk [vmem:[%s161 + $0x18] sm:$0xff] %vm191, %v190
        %p196 = scmp.lt.s32.totalorder %s19, 1
        %s197 = scalar_select %p196, %s19, 1
        %p198 = scmp.lt.s32.totalorder %s20, 1
        %s199 = scalar_select %p198, %s20, 1
        %s200 = smul.addr %s199, 4
        %s201 = smul.addr %s197, 8
        %s202 = sadd.s32 %s200, %s201
        %s203 = smul.addr %s202, 8
        %s204 = scalar_lea.vmem %s1, %s203
        // Predicated region
        $region29: #{tpu_custom_call.1} parent=23 // pred_check
          %p205 = pneg %p75
        $region30: #{tpu_custom_call.1} parent=23 // pred_check_branch
          %207 = sbr.rel (%p205) target = $region32
        $region31: #{tpu_custom_call.1} parent=23 // pred_region
          _
        $region32: #{tpu_custom_call.1} parent=23 // pred_fallthru
          _
      $region24: #{tpu_custom_call.1} parent=5 // pred_fallthru
        _
      %p208 = scmp.le.s32.totalorder 2, %s10
      // Predicated region
      $region33: #{tpu_custom_call.1} parent=5 // pred_check
        %p209 = pneg %p208
      $region34: #{tpu_custom_call.1} parent=5 // pred_check_branch
        %211 = sbr.rel (%p209) target = $region36
      $region35: #{tpu_custom_call.1} parent=5 // pred_region
        %s212 = ssub.s32 %s10, 2
        // Predicated region
        $region37: #{tpu_custom_call.1} parent=35 // pred_check
          %p213 = pneg %p81
        $region38: #{tpu_custom_call.1} parent=35 // pred_check_branch
          %215 = sbr.rel (%p213) target = $region40
        $region39: #{tpu_custom_call.1} parent=35 // pred_region
          %p216 = scmp.lt.s32.totalorder %s21, 1
          %s217 = scalar_select %p216, %s21, 1
          %p218 = scmp.lt.s32.totalorder %s22, 1
          %s219 = scalar_select %p218, %s22, 1
          %s220 = smul.addr %s219, 4
          %s221 = smul.addr %s217, 8
          %s222 = sadd.s32 %s220, %s221
          %s223 = smul.addr %s222, 8
          %s224 = scalar_lea.vmem %s1, %s223
        $region40: #{tpu_custom_call.1} parent=35 // pred_fallthru
          _
      $region36: #{tpu_custom_call.1} parent=5 // pred_fallthru
        _
    $region6: #{tpu_custom_call.1} parent=1 // loop_footer
      %s14 = sadd.s32 1, %s10
    $region7: #{tpu_custom_call.1} parent=1 // loop_footer_branch
      %9 = sbr.rel target = $region3
    $region8: #{tpu_custom_call.1} parent=1 // loop_exit
      _
    %225 = vsyncpa [#allocation3], 1
    %s226 = scalar_lea.sflag [#allocation3], 1
    %227 = vsyncpa %s226, 1

</llo_original>
